<compile_context>
chip_gen: v5e
topology: v5e:2x2
jax: 0.10.0
libtpu: 0.0.40
codegen_flags: <defaults>
</compile_context>

<pallas_src>
import jax
import jax.numpy as jnp
from jax.experimental import pallas as pl
from jax.experimental.pallas import tpu as pltpu


def _round_up(x, m):
    return (x + m - 1) // m * m


def _pad2(a, rows, cols):
    pr, pc = rows - a.shape[0], cols - a.shape[1]
    if pr == 0 and pc == 0:
        return a
    return jnp.pad(a, ((0, pr), (0, pc)))


def _encoder_head_kernel(x_ref, w1t_ref, b1_ref, w2t_ref, b2_ref, out_ref):
    """out = softplus(x @ W1^T + b1) @ [Wm; Wv]^T + [bm | bv], fused per batch tile."""
    # linear_layer: weights are pre-transposed in the wrapper -> plain MXU matmul.
    h = jnp.dot(x_ref[...], w1t_ref[...], preferred_element_type=jnp.float32)
    h = h + b1_ref[...]

    # softplus, numerically stable: max(h,0) + log(1 + exp(-|h|)).
    # Computed in the matmul dtype (bf16): result is cast to bf16 for the next
    # matmul anyway; bf16 EUP is ~2x faster on v6e/v7x (v5e widens internally).
    hb = h.astype(x_ref.dtype)
    sp = jnp.maximum(hb, 0.0) + jnp.log(1.0 + jnp.exp(-jnp.abs(hb)))
    # Zero-padded H lanes give softplus(0)=log 2, but they only ever multiply
    # zero-padded rows of W2^T, so outputs stay correct.

    # fused mean_fc / logvar_fc: one matmul, one lane-dense output slab.
    out = jnp.dot(sp, w2t_ref[...], preferred_element_type=jnp.float32)
    out_ref[...] = (out + b2_ref[...]).astype(out_ref.dtype)


def encoder_sentence_transformer_head(emb, w1, b1, wm, bm, wv, bv, *,
                                      matmul_dtype=jnp.bfloat16,
                                      out_dtype=jnp.float32,
                                      block_n=512):
    """Fused (linear -> softplus -> mean_fc / logvar_fc) head.

    emb: (N, D) precomputed sentence-transformer embeddings.
    w1:  (H, D) linear_layer.weight   b1: (H,)
    wm:  (T, H) mean_fc.weight        bm: (T,)
    wv:  (T, H) logvar_fc.weight      bv: (T,)
    Returns (mean, logvar), each (N, T) in out_dtype.
    """
    n, d = emb.shape
    h_dim, d_w = w1.shape
    assert d_w == d
    t_dim, h_w = wm.shape
    assert h_w == h_dim and wv.shape == (t_dim, h_dim)
    assert b1.shape == (h_dim,) and bm.shape == (t_dim,) and bv.shape == (t_dim,)

    # ---- lane-dense padding targets -------------------------------------
    d_p = _round_up(d, 128)
    h_p = _round_up(h_dim, 128)
    t2_p = _round_up(2 * t_dim, 128)          # fused mean|logvar output width

    # Batch tile: multiple of the full sublane pack for matmul_dtype
    # (16 rows for bf16, 8 for f32, 32 for int8/fp8).
    n_align = max(8, 32 // jnp.dtype(matmul_dtype).itemsize)
    n_min = _round_up(n, n_align)
    tn = min(block_n, n_min)
    # Keep >=2 grid steps whenever the batch allows it, so the "parallel"
    # batch axis can shard across v7x's two TensorCores.
    if n_min // tn < 2 and n_min >= 2 * n_align:
        tn = _round_up((n_min + 1) // 2, n_align)
    n_p = _round_up(n, tn)

    # ---- one-time wrapper-side weight prep (transpose + fuse + pad) ------
    w1t_p = _pad2(jnp.asarray(w1, matmul_dtype).T, d_p, h_p)              # (D, H)
    w2t_p = _pad2(jnp.concatenate([jnp.asarray(wm, matmul_dtype),
                                   jnp.asarray(wv, matmul_dtype)], axis=0).T,
                  h_p, t2_p)                                              # (H, 2T)
    b1_p = _pad2(jnp.asarray(b1, jnp.float32).reshape(1, h_dim), 1, h_p)
    b2_p = _pad2(jnp.concatenate([jnp.asarray(bm, jnp.float32),
                                  jnp.asarray(bv, jnp.float32)]).reshape(1, 2 * t_dim),
                 1, t2_p)

    # ---- x: avoid the pad copy entirely when shapes already line up ------
    x_p = emb if emb.dtype == jnp.dtype(matmul_dtype) else emb.astype(matmul_dtype)
    if (n_p, d_p) != (n, d):
        x_p = jnp.pad(x_p, ((0, n_p - n), (0, d_p - d)))

    def build_call(weight_mode):
        kw = {} if weight_mode is None else {"pipeline_mode": weight_mode}
        resident = lambda i: (0, 0)   # weights / biases stay in VMEM across tiles
        return pl.pallas_call(
            _encoder_head_kernel,
            out_shape=jax.ShapeDtypeStruct((n_p, t2_p), out_dtype),
            grid=(n_p // tn,),
            in_specs=[
                pl.BlockSpec((tn, d_p), lambda i: (i, 0)),    # x batch tile
                pl.BlockSpec((d_p, h_p), resident, **kw),     # W1^T
                pl.BlockSpec((1, h_p), resident, **kw),       # b1
                pl.BlockSpec((h_p, t2_p), resident, **kw),    # [Wm; Wv]^T
                pl.BlockSpec((1, t2_p), resident, **kw),      # [bm | bv]
            ],
            out_specs=pl.BlockSpec((tn, t2_p), lambda i: (i, 0)),
            compiler_params=pltpu.CompilerParams(
                dimension_semantics=("parallel",),            # shard batch tiles across TCs
                vmem_limit_bytes=48 * 1024 * 1024,            # < v7x's 64 MiB physical VMEM
            ),
        )

    args = (x_p, w1t_p, b1_p, w2t_p, b2_p)
    try:
        # Constant-index (resident) blocks don't need double-buffering:
        # single-buffer them to save VMEM and a redundant prologue DMA.
        fused = build_call(pl.Buffered(1))(*args)
    except Exception:
        # Fallback for jax versions without BlockSpec pipeline_mode support.
        fused = build_call(None)(*args)

    mean = fused[:n, :t_dim]
    logvar = fused[:n, t_dim:2 * t_dim]
    return mean, logvar


if __name__ == "__main__":
    # Small shapes consistent with the module:
    #   batch=8 sentences, sentence-transformer hidden_dim=48,
    #   n_hidden_block=64, n_topics=20.
    N, EMB, HID, TOPICS = 8, 48, 64, 20

    key = jax.random.PRNGKey(0)
    k_emb, k_emb2, k_w1, k_b1, k_wm, k_bm, k_wv, k_bv = jax.random.split(key, 8)

    # Precomputed sentence-transformer embeddings (the transformer itself is external).
    emb = jax.random.normal(k_emb, (N, EMB), jnp.float32)

    def uinit(k, shape, fan_in):
        bound = 1.0 / jnp.sqrt(jnp.float32(fan_in))
        return jax.random.uniform(k, shape, jnp.float32, -bound, bound)

    w1 = uinit(k_w1, (HID, EMB), EMB)      # linear_layer.weight  (out, in)
    b1 = uinit(k_b1, (HID,), EMB)          # linear_layer.bias
    wm = uinit(k_wm, (TOPICS, HID), HID)   # mean_fc.weight
    bm = uinit(k_bm, (TOPICS,), HID)       # mean_fc.bias
    wv = uinit(k_wv, (TOPICS, HID), HID)   # logvar_fc.weight
    bv = uinit(k_bv, (TOPICS,), HID)       # logvar_fc.bias

    def ref_head(x):
        pre = x @ w1.T + b1
        h = jnp.maximum(pre, 0.0) + jnp.log1p(jnp.exp(-jnp.abs(pre)))
        return h @ wm.T + bm, h @ wv.T + bv

    mean, logvar = encoder_sentence_transformer_head(emb, w1, b1, wm, bm, wv, bv)
    jax.block_until_ready((mean, logvar))
    assert mean.shape == (N, TOPICS) and mean.dtype == jnp.float32
    assert logvar.shape == (N, TOPICS) and logvar.dtype == jnp.float32

    mean_ref, logvar_ref = ref_head(emb)
    assert jnp.allclose(mean, mean_ref, atol=5e-2, rtol=5e-2)
    assert jnp.allclose(logvar, logvar_ref, atol=5e-2, rtol=5e-2)

    # Second batch size exercises the multi-tile (>=2 grid steps) path + row padding.
    N2 = 40
    emb2 = jax.random.normal(k_emb2, (N2, EMB), jnp.float32)
    mean2, logvar2 = encoder_sentence_transformer_head(emb2, w1, b1, wm, bm, wv, bv)
    jax.block_until_ready((mean2, logvar2))
    mean2_ref, logvar2_ref = ref_head(emb2)
    assert mean2.shape == (N2, TOPICS) and logvar2.shape == (N2, TOPICS)
    assert jnp.allclose(mean2, mean2_ref, atol=5e-2, rtol=5e-2)
    assert jnp.allclose(logvar2, logvar2_ref, atol=5e-2, rtol=5e-2)

    print("KERNEL_OK")
</pallas_src>

<mosaic_0001>
module attributes {stable_mosaic.version = 11 : i64} {
  func.func @_encoder_head_kernel(%arg0: i32, %arg1: memref<16x128xbf16, #tpu.memory_space<vmem>>, %arg2: memref<128x128xbf16, #tpu.memory_space<vmem>>, %arg3: memref<1x128xf32, #tpu.memory_space<vmem>>, %arg4: memref<128x128xbf16, #tpu.memory_space<vmem>>, %arg5: memref<1x128xf32, #tpu.memory_space<vmem>>, %arg6: memref<16x128xf32, #tpu.memory_space<vmem>>) attributes {dimension_semantics = [#tpu.dimension_semantics<parallel>], iteration_bounds = array<i64: 1>, scalar_prefetch = 0 : i64, scratch_operands = 0 : i64, tpu.core_type = #tpu.core_type<tc>, window_params = [{transform_indices = @transform_0, window_bounds = array<i64: 16, 128>}, {pipeline_mode = #tpu.pipeline_mode<synchronous>, transform_indices = @transform_1, window_bounds = array<i64: 128, 128>}, {pipeline_mode = #tpu.pipeline_mode<synchronous>, transform_indices = @transform_2, window_bounds = array<i64: 1, 128>}, {pipeline_mode = #tpu.pipeline_mode<synchronous>, transform_indices = @transform_3, window_bounds = array<i64: 128, 128>}, {pipeline_mode = #tpu.pipeline_mode<synchronous>, transform_indices = @transform_4, window_bounds = array<i64: 1, 128>}, {transform_indices = @transform_5, window_bounds = array<i64: 16, 128>}]} {
    %c0 = arith.constant 0 : index
    %c0_0 = arith.constant 0 : index
    %0 = vector.load %arg1[%c0, %c0_0] : memref<16x128xbf16, #tpu.memory_space<vmem>>, vector<16x128xbf16>
    %c0_1 = arith.constant 0 : index
    %c0_2 = arith.constant 0 : index
    %1 = vector.load %arg2[%c0_1, %c0_2] : memref<128x128xbf16, #tpu.memory_space<vmem>>, vector<128x128xbf16>
    %cst = arith.constant dense<0.000000e+00> : vector<16x128xf32>
    %2 = tpu.matmul %0, %1, %cst {dimension_numbers = #tpu.dot_dimension_numbers<[1], [0], [0], [1], [0, 0, 1, 1], [], []>} : vector<16x128xbf16>, vector<128x128xbf16>, vector<16x128xf32> -> vector<16x128xf32>
    %c0_3 = arith.constant 0 : index
    %c0_4 = arith.constant 0 : index
    %3 = vector.load %arg3[%c0_3, %c0_4] : memref<1x128xf32, #tpu.memory_space<vmem>>, vector<1x128xf32>
    %4 = vector.broadcast %3 : vector<1x128xf32> to vector<16x128xf32>
    %5 = arith.addf %2, %4 : vector<16x128xf32>
    %6 = arith.truncf %5 : vector<16x128xf32> to vector<16x128xbf16>
    %cst_5 = arith.constant 0.000000e+00 : bf16
    %7 = vector.broadcast %cst_5 : bf16 to vector<16x128xbf16>
    %8 = arith.maximumf %6, %7 : vector<16x128xbf16>
    %9 = math.absf %6 : vector<16x128xbf16>
    %cst_6 = arith.constant 0.000000e+00 : bf16
    %10 = vector.broadcast %cst_6 : bf16 to vector<16x128xbf16>
    %11 = arith.subf %10, %9 : vector<16x128xbf16>
    %12 = math.exp %11 : vector<16x128xbf16>
    %cst_7 = arith.constant 1.000000e+00 : bf16
    %13 = vector.broadcast %cst_7 : bf16 to vector<16x128xbf16>
    %14 = arith.addf %13, %12 : vector<16x128xbf16>
    %15 = math.log %14 : vector<16x128xbf16>
    %16 = arith.addf %8, %15 : vector<16x128xbf16>
    %c0_8 = arith.constant 0 : index
    %c0_9 = arith.constant 0 : index
    %17 = vector.load %arg4[%c0_8, %c0_9] : memref<128x128xbf16, #tpu.memory_space<vmem>>, vector<128x128xbf16>
    %cst_10 = arith.constant dense<0.000000e+00> : vector<16x128xf32>
    %18 = tpu.matmul %16, %17, %cst_10 {dimension_numbers = #tpu.dot_dimension_numbers<[1], [0], [0], [1], [0, 0, 1, 1], [], []>} : vector<16x128xbf16>, vector<128x128xbf16>, vector<16x128xf32> -> vector<16x128xf32>
    %c0_11 = arith.constant 0 : index
    %c0_12 = arith.constant 0 : index
    %19 = vector.load %arg5[%c0_11, %c0_12] : memref<1x128xf32, #tpu.memory_space<vmem>>, vector<1x128xf32>
    %20 = vector.broadcast %19 : vector<1x128xf32> to vector<16x128xf32>
    %21 = arith.addf %18, %20 : vector<16x128xf32>
    %c0_13 = arith.constant 0 : index
    %c0_14 = arith.constant 0 : index
    %22 = vector.load %arg6[%c0_13, %c0_14] : memref<16x128xf32, #tpu.memory_space<vmem>>, vector<16x128xf32>
    tpu.vector_store %arg6[%c0_13, %c0_14], %21 {strides = array<i32>} : memref<16x128xf32, #tpu.memory_space<vmem>>, vector<16x128xf32>,
    return
  }
  func.func @transform_0(%arg0: i32) -> (i32, i32) {
    %c0_i32 = arith.constant 0 : i32
    %c0_i32_0 = arith.constant 0 : i32
    return %arg0, %c0_i32 : i32, i32
  }
  func.func @transform_1(%arg0: i32) -> (i32, i32) {
    %c0_i32 = arith.constant 0 : i32
    %c0_i32_0 = arith.constant 0 : i32
    %c0_i32_1 = arith.constant 0 : i32
    return %c0_i32, %c0_i32_0 : i32, i32
  }
  func.func @transform_2(%arg0: i32) -> (i32, i32) {
    %c0_i32 = arith.constant 0 : i32
    %c0_i32_0 = arith.constant 0 : i32
    %c0_i32_1 = arith.constant 0 : i32
    return %c0_i32, %c0_i32_0 : i32, i32
  }
  func.func @transform_3(%arg0: i32) -> (i32, i32) {
    %c0_i32 = arith.constant 0 : i32
    %c0_i32_0 = arith.constant 0 : i32
    %c0_i32_1 = arith.constant 0 : i32
    return %c0_i32, %c0_i32_0 : i32, i32
  }
  func.func @transform_4(%arg0: i32) -> (i32, i32) {
    %c0_i32 = arith.constant 0 : i32
    %c0_i32_0 = arith.constant 0 : i32
    %c0_i32_1 = arith.constant 0 : i32
    return %c0_i32, %c0_i32_0 : i32, i32
  }
  func.func @transform_5(%arg0: i32) -> (i32, i32) {
    %c0_i32 = arith.constant 0 : i32
    %c0_i32_0 = arith.constant 0 : i32
    return %arg0, %c0_i32 : i32, i32
  }
}

module attributes {stable_mosaic.version = 11 : i64} {
  func.func @_encoder_head_kernel(%arg0: i32, %arg1: memref<16x128xbf16, #tpu.memory_space<vmem>>, %arg2: memref<128x128xbf16, #tpu.memory_space<vmem>>, %arg3: memref<1x128xf32, #tpu.memory_space<vmem>>, %arg4: memref<128x128xbf16, #tpu.memory_space<vmem>>, %arg5: memref<1x128xf32, #tpu.memory_space<vmem>>, %arg6: memref<16x128xf32, #tpu.memory_space<vmem>>) attributes {dimension_semantics = [#tpu.dimension_semantics<parallel>], iteration_bounds = array<i64: 1>, scalar_prefetch = 0 : i64, scratch_operands = 0 : i64, tpu.core_type = #tpu.core_type<tc>, window_params = [{transform_indices = @transform_0, window_bounds = array<i64: 16, 128>}, {pipeline_mode = #tpu.pipeline_mode<synchronous>, transform_indices = @transform_1, window_bounds = array<i64: 128, 128>}, {pipeline_mode = #tpu.pipeline_mode<synchronous>, transform_indices = @transform_2, window_bounds = array<i64: 1, 128>}, {pipeline_mode = #tpu.pipeline_mode<synchronous>, transform_indices = @transform_3, window_bounds = array<i64: 128, 128>}, {pipeline_mode = #tpu.pipeline_mode<synchronous>, transform_indices = @transform_4, window_bounds = array<i64: 1, 128>}, {transform_indices = @transform_5, window_bounds = array<i64: 16, 128>}]} {
    %c0 = arith.constant 0 : index
    %c0_0 = arith.constant 0 : index
    %0 = vector.load %arg1[%c0, %c0_0] : memref<16x128xbf16, #tpu.memory_space<vmem>>, vector<16x128xbf16>
    %c0_1 = arith.constant 0 : index
    %c0_2 = arith.constant 0 : index
    %1 = vector.load %arg2[%c0_1, %c0_2] : memref<128x128xbf16, #tpu.memory_space<vmem>>, vector<128x128xbf16>
    %cst = arith.constant dense<0.000000e+00> : vector<16x128xf32>
    %2 = tpu.matmul %0, %1, %cst {dimension_numbers = #tpu.dot_dimension_numbers<[1], [0], [0], [1], [0, 0, 1, 1], [], []>} : vector<16x128xbf16>, vector<128x128xbf16>, vector<16x128xf32> -> vector<16x128xf32>
    %c0_3 = arith.constant 0 : index
    %c0_4 = arith.constant 0 : index
    %3 = vector.load %arg3[%c0_3, %c0_4] : memref<1x128xf32, #tpu.memory_space<vmem>>, vector<1x128xf32>
    %4 = vector.broadcast %3 : vector<1x128xf32> to vector<16x128xf32>
    %5 = arith.addf %2, %4 : vector<16x128xf32>
    %6 = arith.truncf %5 : vector<16x128xf32> to vector<16x128xbf16>
    %cst_5 = arith.constant 0.000000e+00 : bf16
    %7 = vector.broadcast %cst_5 : bf16 to vector<16x128xbf16>
    %8 = arith.maximumf %6, %7 : vector<16x128xbf16>
    %9 = math.absf %6 : vector<16x128xbf16>
    %cst_6 = arith.constant 0.000000e+00 : bf16
    %10 = vector.broadcast %cst_6 : bf16 to vector<16x128xbf16>
    %11 = arith.subf %10, %9 : vector<16x128xbf16>
    %12 = math.exp %11 : vector<16x128xbf16>
    %cst_7 = arith.constant 1.000000e+00 : bf16
    %13 = vector.broadcast %cst_7 : bf16 to vector<16x128xbf16>
    %14 = arith.addf %13, %12 : vector<16x128xbf16>
    %15 = math.log %14 : vector<16x128xbf16>
    %16 = arith.addf %8, %15 : vector<16x128xbf16>
    %c0_8 = arith.constant 0 : index
    %c0_9 = arith.constant 0 : index
    %17 = vector.load %arg4[%c0_8, %c0_9] : memref<128x128xbf16, #tpu.memory_space<vmem>>, vector<128x128xbf16>
    %cst_10 = arith.constant dense<0.000000e+00> : vector<16x128xf32>
    %18 = tpu.matmul %16, %17, %cst_10 {dimension_numbers = #tpu.dot_dimension_numbers<[1], [0], [0], [1], [0, 0, 1, 1], [], []>} : vector<16x128xbf16>, vector<128x128xbf16>, vector<16x128xf32> -> vector<16x128xf32>
    %c0_11 = arith.constant 0 : index
    %c0_12 = arith.constant 0 : index
    %19 = vector.load %arg5[%c0_11, %c0_12] : memref<1x128xf32, #tpu.memory_space<vmem>>, vector<1x128xf32>
    %20 = vector.broadcast %19 : vector<1x128xf32> to vector<16x128xf32>
    %21 = arith.addf %18, %20 : vector<16x128xf32>
    %c0_13 = arith.constant 0 : index
    %c0_14 = arith.constant 0 : index
    %22 = vector.load %arg6[%c0_13, %c0_14] : memref<16x128xf32, #tpu.memory_space<vmem>>, vector<16x128xf32>
    tpu.vector_store %arg6[%c0_13, %c0_14], %21 {strides = array<i32>} : memref<16x128xf32, #tpu.memory_space<vmem>>, vector<16x128xf32>,
    return
  }
  func.func @transform_0(%arg0: i32) -> (i32, i32) {
    %c0_i32 = arith.constant 0 : i32
    %c0_i32_0 = arith.constant 0 : i32
    return %arg0, %c0_i32 : i32, i32
  }
  func.func @transform_1(%arg0: i32) -> (i32, i32) {
    %c0_i32 = arith.constant 0 : i32
    %c0_i32_0 = arith.constant 0 : i32
    %c0_i32_1 = arith.constant 0 : i32
    return %c0_i32, %c0_i32_0 : i32, i32
  }
  func.func @transform_2(%arg0: i32) -> (i32, i32) {
    %c0_i32 = arith.constant 0 : i32
    %c0_i32_0 = arith.constant 0 : i32
    %c0_i32_1 = arith.constant 0 : i32
    return %c0_i32, %c0_i32_0 : i32, i32
  }
  func.func @transform_3(%arg0: i32) -> (i32, i32) {
    %c0_i32 = arith.constant 0 : i32
    %c0_i32_0 = arith.constant 0 : i32
    %c0_i32_1 = arith.constant 0 : i32
    return %c0_i32, %c0_i32_0 : i32, i32
  }
  func.func @transform_4(%arg0: i32) -> (i32, i32) {
    %c0_i32 = arith.constant 0 : i32
    %c0_i32_0 = arith.constant 0 : i32
    %c0_i32_1 = arith.constant 0 : i32
    return %c0_i32, %c0_i32_0 : i32, i32
  }
  func.func @transform_5(%arg0: i32) -> (i32, i32) {
    %c0_i32 = arith.constant 0 : i32
    %c0_i32_0 = arith.constant 0 : i32
    return %arg0, %c0_i32 : i32, i32
  }
}

</mosaic_0001>

<llo_original>
// kernel: tpu_custom_call.1
$region0: #{tpu_custom_call.1}
  #allocation0 [shape = 'u32[]', space=smem, size = 0x4, offset = 0x4, fixed_abs, tag = 'smem constant byte address 0x4 - core index']
  #allocation1 [shape = 'u32[72,128]{1,0:T(1,128)}', space=vmem, size = 0x9000, scoped, tag = 'internal scratch']
  %s0 = inlined_call_operand.hbm [shape: bf16[16,128], index: 0, kind: input, shape index: {}]
  %s1 = inlined_call_operand.hbm [shape: bf16[128,128], index: 1, kind: input, shape index: {}]
  %s2 = inlined_call_operand.vmem [shape: f32[1,128], index: 2, kind: input, shape index: {}]
  %s3 = inlined_call_operand.hbm [shape: bf16[128,128], index: 3, kind: input, shape index: {}]
  %s4 = inlined_call_operand.vmem [shape: f32[1,128], index: 4, kind: input, shape index: {}]
  %s5 = inlined_call_operand.hbm [shape: f32[16,128], index: 5, kind: output, shape index: {}]
  %s6 = sld [smem:[#allocation0]]
  $region42: #{tpu_custom_call.1} parent=0
    _
  %s8 = ssub.s32 1, %s6
  %s9 = scalar_select 0, %s8, %s6
  $region1: #{tpu_custom_call.1} parent=0
    #allocation2 [shape = 'u8[4096]{0}', space=vmem, size = 0x1000, scoped, tag = 'input window, operand 0, single buffered']
    #allocation3 [shape = 's32[1]{0}', space=sflag, size = 0x4, scoped, tag = 'scoped memory for tpu_custom_call.1']
    #allocation4 [shape = 's32[1]{0}', space=sflag, size = 0x4, scoped, tag = 'scoped memory for tpu_custom_call.1']
    #allocation5 [shape = 'u8[32768]{0}', space=vmem, size = 0x8000, scoped, tag = 'input window, operand 1, single buffered']
    #allocation6 [shape = 's32[1]{0}', space=sflag, size = 0x4, scoped, tag = 'scoped memory for tpu_custom_call.1']
    #allocation7 [shape = 'u8[32768]{0}', space=vmem, size = 0x8000, scoped, tag = 'input window, operand 3, single buffered']
    #allocation8 [shape = 'u8[8192]{0}', space=vmem, size = 0x2000, scoped, tag = 'output window, operand 0, single buffered']
    %10 = vsyncpa [#allocation3], 0
    %11 = vsyncpa [#allocation6], 0
    %12 = vsyncpa [#allocation4], 0
    // Predicated region
    $region2: #{tpu_custom_call.1} parent=1 // pred_check
      _
    $region3: #{tpu_custom_call.1} parent=1 // pred_check_branch
      %14 = sbr.rel (0) target = $region5
    $region4: #{tpu_custom_call.1} parent=1 // pred_region
      %16 = vsyncadd [#allocation3], 0
      %s17 = sshll.u32 %s0, 4
      %s18 = int_to_ptr.hbm [resolvable:$true] %s17
      %s19 = sshll.u32 [#allocation2], 4
      %s20 = int_to_ptr.vmem [resolvable:$true] %s19
      %25 = dma.hbm_to_vmem [thread:$0]  %s18, 128, %s20, [#allocation3], 64, 64, 4
    $region5: #{tpu_custom_call.1} parent=1 // pred_fallthru
      _
    // Predicated region
    $region6: #{tpu_custom_call.1} parent=1 // pred_check
      _
    $region7: #{tpu_custom_call.1} parent=1 // pred_check_branch
      %27 = sbr.rel (0) target = $region9
    $region8: #{tpu_custom_call.1} parent=1 // pred_region
      %29 = vsyncadd [#allocation6], 0
      %s30 = sshll.u32 %s1, 4
      %s31 = int_to_ptr.hbm [resolvable:$true] %s30
      %s32 = sshll.u32 [#allocation5], 4
      %s33 = int_to_ptr.vmem [resolvable:$true] %s32
      %38 = dma.hbm_to_vmem [thread:$0]  %s31, 1024, %s33, [#allocation6], 64, 64, 4
    $region9: #{tpu_custom_call.1} parent=1 // pred_fallthru
      _
    // Predicated region
    $region10: #{tpu_custom_call.1} parent=1 // pred_check
      _
    $region11: #{tpu_custom_call.1} parent=1 // pred_check_branch
      %40 = sbr.rel (0) target = $region13
    $region12: #{tpu_custom_call.1} parent=1 // pred_region
      _
    $region13: #{tpu_custom_call.1} parent=1 // pred_fallthru
      _
    // Predicated region
    $region14: #{tpu_custom_call.1} parent=1 // pred_check
      _
    $region15: #{tpu_custom_call.1} parent=1 // pred_check_branch
      %42 = sbr.rel (0) target = $region17
    $region16: #{tpu_custom_call.1} parent=1 // pred_region
      %44 = vsyncadd [#allocation6], 0
      %s45 = sshll.u32 %s3, 4
      %s46 = int_to_ptr.hbm [resolvable:$true] %s45
      %s47 = sshll.u32 [#allocation7], 4
      %s48 = int_to_ptr.vmem [resolvable:$true] %s47
      %53 = dma.hbm_to_vmem [thread:$0]  %s46, 1024, %s48, [#allocation6], 64, 64, 4
    $region17: #{tpu_custom_call.1} parent=1 // pred_fallthru
      _
    // Predicated region
    $region18: #{tpu_custom_call.1} parent=1 // pred_check
      _
    $region19: #{tpu_custom_call.1} parent=1 // pred_check_branch
      %55 = sbr.rel (0) target = $region21
    $region20: #{tpu_custom_call.1} parent=1 // pred_region
      _
    $region21: #{tpu_custom_call.1} parent=1 // pred_fallthru
      _
    // Predicated region
    $region22: #{tpu_custom_call.1} parent=1 // pred_check
      _
    $region23: #{tpu_custom_call.1} parent=1 // pred_check_branch
      %57 = sbr.rel (0) target = $region25
    $region24: #{tpu_custom_call.1} parent=1 // pred_region
      %59 = dma.done [#allocation3], 128
    $region25: #{tpu_custom_call.1} parent=1 // pred_fallthru
      _
    // Predicated region
    $region26: #{tpu_custom_call.1} parent=1 // pred_check
      _
    $region27: #{tpu_custom_call.1} parent=1 // pred_check_branch
      %61 = sbr.rel (0) target = $region29
    $region28: #{tpu_custom_call.1} parent=1 // pred_region
      %63 = dma.done [#allocation6], 1024
    $region29: #{tpu_custom_call.1} parent=1 // pred_fallthru
      _
    // Predicated region
    $region30: #{tpu_custom_call.1} parent=1 // pred_check
      _
    $region31: #{tpu_custom_call.1} parent=1 // pred_check_branch
      %65 = sbr.rel (0) target = $region33
    $region32: #{tpu_custom_call.1} parent=1 // pred_region
      %67 = dma.done [#allocation6], 1024
    $region33: #{tpu_custom_call.1} parent=1 // pred_fallthru
      _
    %v68 = vld [vmem:[#allocation2] sm:$0xf]
    %v69 = vld [vmem:[#allocation2 + $0x4] sm:$0xf]
    %v70 = vld [vmem:[#allocation5] sm:$0xf]
    %v71 = vld [vmem:[#allocation5 + $0x4] sm:$0xf]
    %v72 = vld [vmem:[#allocation5 + $0x8] sm:$0xf]
    %v73 = vld [vmem:[#allocation5 + $0xc] sm:$0xf]
    %v74 = vld [vmem:[#allocation5 + $0x10] sm:$0xf]
    %v75 = vld [vmem:[#allocation5 + $0x14] sm:$0xf]
    %v76 = vld [vmem:[#allocation5 + $0x18] sm:$0xf]
    %v77 = vld [vmem:[#allocation5 + $0x1c] sm:$0xf]
    %v78 = vld [vmem:[#allocation5 + $0x20] sm:$0xf]
    %v79 = vld [vmem:[#allocation5 + $0x24] sm:$0xf]
    %v80 = vld [vmem:[#allocation5 + $0x28] sm:$0xf]
    %v81 = vld [vmem:[#allocation5 + $0x2c] sm:$0xf]
    %v82 = vld [vmem:[#allocation5 + $0x30] sm:$0xf]
    %v83 = vld [vmem:[#allocation5 + $0x34] sm:$0xf]
    %v84 = vld [vmem:[#allocation5 + $0x38] sm:$0xf]
    %v85 = vld [vmem:[#allocation5 + $0x3c] sm:$0xf]
    %v86 = vld [vmem:[%s2] sm:$0x1]
    %v88 = vperm.slane %v86, 0
    %v92 = vunpack.c.l.b16 %v68
    %v93 = vunpack.c.l.b16 %v69
    %v94 = vpack.c.b16 %v93, %v92
    %v112 = vunpack.c.l.b16 %v70
    %v113 = vunpack.c.l.b16 %v71
    %v114 = vunpack.c.l.b16 %v72
    %v115 = vunpack.c.l.b16 %v73
    %v116 = vunpack.c.l.b16 %v74
    %v117 = vunpack.c.l.b16 %v75
    %v118 = vunpack.c.l.b16 %v76
    %v119 = vunpack.c.l.b16 %v77
    %v120 = vunpack.c.l.b16 %v78
    %v121 = vunpack.c.l.b16 %v79
    %v122 = vunpack.c.l.b16 %v80
    %v123 = vunpack.c.l.b16 %v81
    %v124 = vunpack.c.l.b16 %v82
    %v125 = vunpack.c.l.b16 %v83
    %v126 = vunpack.c.l.b16 %v84
    %v127 = vunpack.c.l.b16 %v85
    %v128 = vpack.c.b16 %v113, %v112
    %v129 = vpack.c.b16 %v115, %v114
    %v130 = vpack.c.b16 %v117, %v116
    %v131 = vpack.c.b16 %v119, %v118
    %v132 = vpack.c.b16 %v121, %v120
    %v133 = vpack.c.b16 %v123, %v122
    %v134 = vpack.c.b16 %v125, %v124
    %v135 = vpack.c.b16 %v127, %v126
    %144 = vmatpush.bf16.msra.mxu0 %v135
    %145 = vmatpush.bf16.msra.mxu0 %v134
    %146 = vmatpush.bf16.msra.mxu0 %v133
    %147 = vmatpush.bf16.msra.mxu0 %v132
    %148 = vmatpush.bf16.msra.mxu0 %v131
    %149 = vmatpush.bf16.msra.mxu0 %v130
    %150 = vmatpush.bf16.msra.mxu0 %v129
    %151 = vmatpush.bf16.msra.mxu0 %v128
    %152 = vmatmul.bf16.gmra.mxu0 %v94
    %v153 = vpop.f32.mrf.mxu0
    %v154 = vadd.f32 %v88, %v153
    %v155 = vpop.f32.mrf.mxu0
    %v156 = vadd.f32 %v88, %v155
    %157 = vdwg.mxu0
    %v158 = vpack.c.bf16 %v154, %v154
    %v159 = vpack.c.bf16 %v156, %v156
    %v160 = vunpack.c.l.bf16 %v158
    %v161 = vunpack.c.l.bf16 %v159
    %v162 = vmax.f32 %v160, 0.0
    %v163 = vmax.f32 %v161, 0.0
    %v164 = vpack.c.bf16 %v162, %v162
    %v165 = vpack.c.bf16 %v163, %v163
    %v166 = vand.u32 2147450879, %v158
    %v167 = vand.u32 2147450879, %v159
    %v168 = vunpack.c.l.bf16 %v166
    %v169 = vunpack.c.l.bf16 %v167
    %v170 = vsub.f32 0.0, %v168
    %v171 = vsub.f32 0.0, %v169
    %v172 = vpack.c.bf16 %v170, %v170
    %v173 = vpack.c.bf16 %v171, %v171
    %v174 = vunpack.c.l.bf16 %v172
    %v175 = vunpack.c.l.bf16 %v173
    %v176 = vmul.f32 %v174, 1.442695
    %v177 = vpow.pop %v176
    %v178 = vmul.f32 %v175, 1.442695
    %v179 = vpow.pop %v178
    %v180 = vpack.c.bf16 %v177, %v177
    %v181 = vpack.c.bf16 %v179, %v179
    %v182 = vunpack.c.l.bf16 %v180
    %v183 = vunpack.c.l.bf16 %v181
    %v184 = vadd.f32 %v182, 1.0
    %v185 = vadd.f32 %v183, 1.0
    %v186 = vpack.c.bf16 %v184, %v184
    %v187 = vpack.c.bf16 %v185, %v185
    %v188 = vunpack.c.l.bf16 %v186
    %v189 = vunpack.c.l.bf16 %v187
    %v190 = vlog2.pop %v188
    %v191 = vmul.f32 %v190, 0.6931472
    %v192 = vlog2.pop %v189
    %v193 = vmul.f32 %v192, 0.6931472
    %v194 = vpack.c.bf16 %v191, %v191
    %v195 = vpack.c.bf16 %v193, %v193
    %v196 = vunpack.c.l.bf16 %v164
    %v197 = vunpack.c.l.bf16 %v165
    %v198 = vunpack.c.l.bf16 %v194
    %v199 = vunpack.c.l.bf16 %v195
    %v200 = vadd.f32 %v196, %v198
    %v201 = vadd.f32 %v197, %v199
    %v202 = vpack.c.bf16 %v201, %v200
    %v203 = vld [vmem:[#allocation7] sm:$0xf]
    %v204 = vld [vmem:[#allocation7 + $0x4] sm:$0xf]
    %v205 = vld [vmem:[#allocation7 + $0x8] sm:$0xf]
    %v206 = vld [vmem:[#allocation7 + $0xc] sm:$0xf]
    %v207 = vld [vmem:[#allocation7 + $0x10] sm:$0xf]
    %v208 = vld [vmem:[#allocation7 + $0x14] sm:$0xf]
    %v209 = vld [vmem:[#allocation7 + $0x18] sm:$0xf]
    %v210 = vld [vmem:[#allocation7 + $0x1c] sm:$0xf]
    %v211 = vld [vmem:[#allocation7 + $0x20] sm:$0xf]
    %v212 = vld [vmem:[#allocation7 + $0x24] sm:$0xf]
    %v213 = vld [vmem:[#allocation7 + $0x28] sm:$0xf]
    %v214 = vld [vmem:[#allocation7 + $0x2c] sm:$0xf]
    %v215 = vld [vmem:[#allocation7 + $0x30] sm:$0xf]
    %v216 = vld [vmem:[#allocation7 + $0x34] sm:$0xf]
    %v217 = vld [vmem:[#allocation7 + $0x38] sm:$0xf]
    %v218 = vld [vmem:[#allocation7 + $0x3c] sm:$0xf]
    %v219 = vld [vmem:[%s4] sm:$0x1]
    %v221 = vperm.slane %v219, 0
    %v239 = vunpack.c.l.b16 %v203
    %v240 = vunpack.c.l.b16 %v204
    %v241 = vunpack.c.l.b16 %v205
    %v242 = vunpack.c.l.b16 %v206
    %v243 = vunpack.c.l.b16 %v207
    %v244 = vunpack.c.l.b16 %v208
    %v245 = vunpack.c.l.b16 %v209
    %v246 = vunpack.c.l.b16 %v210
    %v247 = vunpack.c.l.b16 %v211
    %v248 = vunpack.c.l.b16 %v212
    %v249 = vunpack.c.l.b16 %v213
    %v250 = vunpack.c.l.b16 %v214
    %v251 = vunpack.c.l.b16 %v215
    %v252 = vunpack.c.l.b16 %v216
    %v253 = vunpack.c.l.b16 %v217
    %v254 = vunpack.c.l.b16 %v218
    %v255 = vpack.c.b16 %v240, %v239
    %v256 = vpack.c.b16 %v242, %v241
    %v257 = vpack.c.b16 %v244, %v243
    %v258 = vpack.c.b16 %v246, %v245
    %v259 = vpack.c.b16 %v248, %v247
    %v260 = vpack.c.b16 %v250, %v249
    %v261 = vpack.c.b16 %v252, %v251
    %v262 = vpack.c.b16 %v254, %v253
    %271 = vmatpush.bf16.msra.mxu0 %v262
    %272 = vmatpush.bf16.msra.mxu0 %v261
    %273 = vmatpush.bf16.msra.mxu0 %v260
    %274 = vmatpush.bf16.msra.mxu0 %v259
    %275 = vmatpush.bf16.msra.mxu0 %v258
    %276 = vmatpush.bf16.msra.mxu0 %v257
    %277 = vmatpush.bf16.msra.mxu0 %v256
    %278 = vmatpush.bf16.msra.mxu0 %v255
    %279 = vmatmul.bf16.gmra.mxu0 %v202
    %v280 = vpop.f32.mrf.mxu0
    %v281 = vadd.f32 %v221, %v280
    %v282 = vpop.f32.mrf.mxu0
    %v283 = vadd.f32 %v221, %v282
    %284 = vdwg.mxu0
    %285 = vst [vmem:[#allocation8] sm:$0xff] %v281
    %286 = vst [vmem:[#allocation8 + $0x8] sm:$0xff] %v283
    // Predicated region
    $region34: #{tpu_custom_call.1} parent=1 // pred_check
      _
    $region35: #{tpu_custom_call.1} parent=1 // pred_check_branch
      %288 = sbr.rel (0) target = $region37
    $region36: #{tpu_custom_call.1} parent=1 // pred_region
      %290 = vsyncadd [#allocation4], 0
      %s291 = sshll.u32 [#allocation8], 4
      %s292 = int_to_ptr.vmem [resolvable:$true] %s291
      %s293 = sshll.u32 %s5, 4
      %s294 = int_to_ptr.hbm [resolvable:$true] %s293
      %299 = dma.vmem_to_hbm [thread:$0]  %s292, 256, %s294, [#allocation4], 128, 128, 8
    $region37: #{tpu_custom_call.1} parent=1 // pred_fallthru
      _
    // Predicated region
    $region38: #{tpu_custom_call.1} parent=1 // pred_check
      _
    $region39: #{tpu_custom_call.1} parent=1 // pred_check_branch
      %301 = sbr.rel (0) target = $region41
    $region40: #{tpu_custom_call.1} parent=1 // pred_region
      %303 = dma.done [#allocation4], 256
    $region41: #{tpu_custom_call.1} parent=1 // pred_fallthru
      _
    %304 = vsyncpa [#allocation3], 1
    %305 = vsyncpa [#allocation6], 1
    %306 = vsyncpa [#allocation4], 1

// kernel: tpu_custom_call.1
$region0: #{tpu_custom_call.1}
  #allocation0 [shape = 'u32[]', space=smem, size = 0x4, offset = 0x4, fixed_abs, tag = 'smem constant byte address 0x4 - core index']
  #allocation1 [shape = 'u32[72,128]{1,0:T(1,128)}', space=vmem, size = 0x9000, scoped, tag = 'internal scratch']
  %s0 = inlined_call_operand.hbm [shape: bf16[16,128], index: 0, kind: input, shape index: {}]
  %s1 = inlined_call_operand.hbm [shape: bf16[128,128], index: 1, kind: input, shape index: {}]
  %s2 = inlined_call_operand.vmem [shape: f32[1,128], index: 2, kind: input, shape index: {}]
  %s3 = inlined_call_operand.hbm [shape: bf16[128,128], index: 3, kind: input, shape index: {}]
  %s4 = inlined_call_operand.vmem [shape: f32[1,128], index: 4, kind: input, shape index: {}]
  %s5 = inlined_call_operand.hbm [shape: f32[16,128], index: 5, kind: output, shape index: {}]
  %s6 = sld [smem:[#allocation0]]
  $region42: #{tpu_custom_call.1} parent=0
    _
  %s8 = ssub.s32 1, %s6
  %s9 = scalar_select 0, %s8, %s6
  $region1: #{tpu_custom_call.1} parent=0
    #allocation2 [shape = 'u8[4096]{0}', space=vmem, size = 0x1000, scoped, tag = 'input window, operand 0, single buffered']
    #allocation3 [shape = 's32[1]{0}', space=sflag, size = 0x4, scoped, tag = 'scoped memory for tpu_custom_call.1']
    #allocation4 [shape = 's32[1]{0}', space=sflag, size = 0x4, scoped, tag = 'scoped memory for tpu_custom_call.1']
    #allocation5 [shape = 'u8[32768]{0}', space=vmem, size = 0x8000, scoped, tag = 'input window, operand 1, single buffered']
    #allocation6 [shape = 's32[1]{0}', space=sflag, size = 0x4, scoped, tag = 'scoped memory for tpu_custom_call.1']
    #allocation7 [shape = 'u8[32768]{0}', space=vmem, size = 0x8000, scoped, tag = 'input window, operand 3, single buffered']
    #allocation8 [shape = 'u8[8192]{0}', space=vmem, size = 0x2000, scoped, tag = 'output window, operand 0, single buffered']
    %10 = vsyncpa [#allocation3], 0
    %11 = vsyncpa [#allocation6], 0
    %12 = vsyncpa [#allocation4], 0
    // Predicated region
    $region2: #{tpu_custom_call.1} parent=1 // pred_check
      _
    $region3: #{tpu_custom_call.1} parent=1 // pred_check_branch
      %14 = sbr.rel (0) target = $region5
    $region4: #{tpu_custom_call.1} parent=1 // pred_region
      %16 = vsyncadd [#allocation3], 0
      %s17 = sshll.u32 %s0, 4
      %s18 = int_to_ptr.hbm [resolvable:$true] %s17
      %s19 = sshll.u32 [#allocation2], 4
      %s20 = int_to_ptr.vmem [resolvable:$true] %s19
      %25 = dma.hbm_to_vmem [thread:$0]  %s18, 128, %s20, [#allocation3], 64, 64, 4
    $region5: #{tpu_custom_call.1} parent=1 // pred_fallthru
      _
    // Predicated region
    $region6: #{tpu_custom_call.1} parent=1 // pred_check
      _
    $region7: #{tpu_custom_call.1} parent=1 // pred_check_branch
      %27 = sbr.rel (0) target = $region9
    $region8: #{tpu_custom_call.1} parent=1 // pred_region
      %29 = vsyncadd [#allocation6], 0
      %s30 = sshll.u32 %s1, 4
      %s31 = int_to_ptr.hbm [resolvable:$true] %s30
      %s32 = sshll.u32 [#allocation5], 4
      %s33 = int_to_ptr.vmem [resolvable:$true] %s32
      %38 = dma.hbm_to_vmem [thread:$0]  %s31, 1024, %s33, [#allocation6], 64, 64, 4
    $region9: #{tpu_custom_call.1} parent=1 // pred_fallthru
      _
    // Predicated region
    $region10: #{tpu_custom_call.1} parent=1 // pred_check
      _
    $region11: #{tpu_custom_call.1} parent=1 // pred_check_branch
      %40 = sbr.rel (0) target = $region13
    $region12: #{tpu_custom_call.1} parent=1 // pred_region
      _
    $region13: #{tpu_custom_call.1} parent=1 // pred_fallthru
      _
    // Predicated region
    $region14: #{tpu_custom_call.1} parent=1 // pred_check
      _
    $region15: #{tpu_custom_call.1} parent=1 // pred_check_branch
      %42 = sbr.rel (0) target = $region17
    $region16: #{tpu_custom_call.1} parent=1 // pred_region
      %44 = vsyncadd [#allocation6], 0
      %s45 = sshll.u32 %s3, 4
      %s46 = int_to_ptr.hbm [resolvable:$true] %s45
      %s47 = sshll.u32 [#allocation7], 4
      %s48 = int_to_ptr.vmem [resolvable:$true] %s47
      %53 = dma.hbm_to_vmem [thread:$0]  %s46, 1024, %s48, [#allocation6], 64, 64, 4
    $region17: #{tpu_custom_call.1} parent=1 // pred_fallthru
      _
    // Predicated region
    $region18: #{tpu_custom_call.1} parent=1 // pred_check
      _
    $region19: #{tpu_custom_call.1} parent=1 // pred_check_branch
      %55 = sbr.rel (0) target = $region21
    $region20: #{tpu_custom_call.1} parent=1 // pred_region
      _
    $region21: #{tpu_custom_call.1} parent=1 // pred_fallthru
      _
    // Predicated region
    $region22: #{tpu_custom_call.1} parent=1 // pred_check
      _
    $region23: #{tpu_custom_call.1} parent=1 // pred_check_branch
      %57 = sbr.rel (0) target = $region25
    $region24: #{tpu_custom_call.1} parent=1 // pred_region
      %59 = dma.done [#allocation3], 128
    $region25: #{tpu_custom_call.1} parent=1 // pred_fallthru
      _
    // Predicated region
    $region26: #{tpu_custom_call.1} parent=1 // pred_check
      _
    $region27: #{tpu_custom_call.1} parent=1 // pred_check_branch
      %61 = sbr.rel (0) target = $region29
    $region28: #{tpu_custom_call.1} parent=1 // pred_region
      %63 = dma.done [#allocation6], 1024
    $region29: #{tpu_custom_call.1} parent=1 // pred_fallthru
      _
    // Predicated region
    $region30: #{tpu_custom_call.1} parent=1 // pred_check
      _
    $region31: #{tpu_custom_call.1} parent=1 // pred_check_branch
      %65 = sbr.rel (0) target = $region33
    $region32: #{tpu_custom_call.1} parent=1 // pred_region
      %67 = dma.done [#allocation6], 1024
    $region33: #{tpu_custom_call.1} parent=1 // pred_fallthru
      _
    %v68 = vld [vmem:[#allocation2] sm:$0xf]
    %v69 = vld [vmem:[#allocation2 + $0x4] sm:$0xf]
    %v70 = vld [vmem:[#allocation5] sm:$0xf]
    %v71 = vld [vmem:[#allocation5 + $0x4] sm:$0xf]
    %v72 = vld [vmem:[#allocation5 + $0x8] sm:$0xf]
    %v73 = vld [vmem:[#allocation5 + $0xc] sm:$0xf]
    %v74 = vld [vmem:[#allocation5 + $0x10] sm:$0xf]
    %v75 = vld [vmem:[#allocation5 + $0x14] sm:$0xf]
    %v76 = vld [vmem:[#allocation5 + $0x18] sm:$0xf]
    %v77 = vld [vmem:[#allocation5 + $0x1c] sm:$0xf]
    %v78 = vld [vmem:[#allocation5 + $0x20] sm:$0xf]
    %v79 = vld [vmem:[#allocation5 + $0x24] sm:$0xf]
    %v80 = vld [vmem:[#allocation5 + $0x28] sm:$0xf]
    %v81 = vld [vmem:[#allocation5 + $0x2c] sm:$0xf]
    %v82 = vld [vmem:[#allocation5 + $0x30] sm:$0xf]
    %v83 = vld [vmem:[#allocation5 + $0x34] sm:$0xf]
    %v84 = vld [vmem:[#allocation5 + $0x38] sm:$0xf]
    %v85 = vld [vmem:[#allocation5 + $0x3c] sm:$0xf]
    %v86 = vld [vmem:[%s2] sm:$0x1]
    %v88 = vperm.slane %v86, 0
    %v92 = vunpack.c.l.b16 %v68
    %v93 = vunpack.c.l.b16 %v69
    %v94 = vpack.c.b16 %v93, %v92
    %v112 = vunpack.c.l.b16 %v70
    %v113 = vunpack.c.l.b16 %v71
    %v114 = vunpack.c.l.b16 %v72
    %v115 = vunpack.c.l.b16 %v73
    %v116 = vunpack.c.l.b16 %v74
    %v117 = vunpack.c.l.b16 %v75
    %v118 = vunpack.c.l.b16 %v76
    %v119 = vunpack.c.l.b16 %v77
    %v120 = vunpack.c.l.b16 %v78
    %v121 = vunpack.c.l.b16 %v79
    %v122 = vunpack.c.l.b16 %v80
    %v123 = vunpack.c.l.b16 %v81
    %v124 = vunpack.c.l.b16 %v82
    %v125 = vunpack.c.l.b16 %v83
    %v126 = vunpack.c.l.b16 %v84
    %v127 = vunpack.c.l.b16 %v85
    %v128 = vpack.c.b16 %v113, %v112
    %v129 = vpack.c.b16 %v115, %v114
    %v130 = vpack.c.b16 %v117, %v116
    %v131 = vpack.c.b16 %v119, %v118
    %v132 = vpack.c.b16 %v121, %v120
    %v133 = vpack.c.b16 %v123, %v122
    %v134 = vpack.c.b16 %v125, %v124
    %v135 = vpack.c.b16 %v127, %v126
    %144 = vmatpush.bf16.msra.mxu0 %v135
    %145 = vmatpush.bf16.msra.mxu0 %v134
    %146 = vmatpush.bf16.msra.mxu0 %v133
    %147 = vmatpush.bf16.msra.mxu0 %v132
    %148 = vmatpush.bf16.msra.mxu0 %v131
    %149 = vmatpush.bf16.msra.mxu0 %v130
    %150 = vmatpush.bf16.msra.mxu0 %v129
    %151 = vmatpush.bf16.msra.mxu0 %v128
    %152 = vmatmul.bf16.gmra.mxu0 %v94
    %v153 = vpop.f32.mrf.mxu0
    %v154 = vadd.f32 %v88, %v153
    %v155 = vpop.f32.mrf.mxu0
    %v156 = vadd.f32 %v88, %v155
    %157 = vdwg.mxu0
    %v158 = vpack.c.bf16 %v154, %v154
    %v159 = vpack.c.bf16 %v156, %v156
    %v160 = vunpack.c.l.bf16 %v158
    %v161 = vunpack.c.l.bf16 %v159
    %v162 = vmax.f32 %v160, 0.0
    %v163 = vmax.f32 %v161, 0.0
    %v164 = vpack.c.bf16 %v162, %v162
    %v165 = vpack.c.bf16 %v163, %v163
    %v166 = vand.u32 2147450879, %v158
    %v167 = vand.u32 2147450879, %v159
    %v168 = vunpack.c.l.bf16 %v166
    %v169 = vunpack.c.l.bf16 %v167
    %v170 = vsub.f32 0.0, %v168
    %v171 = vsub.f32 0.0, %v169
    %v172 = vpack.c.bf16 %v170, %v170
    %v173 = vpack.c.bf16 %v171, %v171
    %v174 = vunpack.c.l.bf16 %v172
    %v175 = vunpack.c.l.bf16 %v173
    %v176 = vmul.f32 %v174, 1.442695
    %v177 = vpow.pop %v176
    %v178 = vmul.f32 %v175, 1.442695
    %v179 = vpow.pop %v178
    %v180 = vpack.c.bf16 %v177, %v177
    %v181 = vpack.c.bf16 %v179, %v179
    %v182 = vunpack.c.l.bf16 %v180
    %v183 = vunpack.c.l.bf16 %v181
    %v184 = vadd.f32 %v182, 1.0
    %v185 = vadd.f32 %v183, 1.0
    %v186 = vpack.c.bf16 %v184, %v184
    %v187 = vpack.c.bf16 %v185, %v185
    %v188 = vunpack.c.l.bf16 %v186
    %v189 = vunpack.c.l.bf16 %v187
    %v190 = vlog2.pop %v188
    %v191 = vmul.f32 %v190, 0.6931472
    %v192 = vlog2.pop %v189
    %v193 = vmul.f32 %v192, 0.6931472
    %v194 = vpack.c.bf16 %v191, %v191
    %v195 = vpack.c.bf16 %v193, %v193
    %v196 = vunpack.c.l.bf16 %v164
    %v197 = vunpack.c.l.bf16 %v165
    %v198 = vunpack.c.l.bf16 %v194
    %v199 = vunpack.c.l.bf16 %v195
    %v200 = vadd.f32 %v196, %v198
    %v201 = vadd.f32 %v197, %v199
    %v202 = vpack.c.bf16 %v201, %v200
    %v203 = vld [vmem:[#allocation7] sm:$0xf]
    %v204 = vld [vmem:[#allocation7 + $0x4] sm:$0xf]
    %v205 = vld [vmem:[#allocation7 + $0x8] sm:$0xf]
    %v206 = vld [vmem:[#allocation7 + $0xc] sm:$0xf]
    %v207 = vld [vmem:[#allocation7 + $0x10] sm:$0xf]
    %v208 = vld [vmem:[#allocation7 + $0x14] sm:$0xf]
    %v209 = vld [vmem:[#allocation7 + $0x18] sm:$0xf]
    %v210 = vld [vmem:[#allocation7 + $0x1c] sm:$0xf]
    %v211 = vld [vmem:[#allocation7 + $0x20] sm:$0xf]
    %v212 = vld [vmem:[#allocation7 + $0x24] sm:$0xf]
    %v213 = vld [vmem:[#allocation7 + $0x28] sm:$0xf]
    %v214 = vld [vmem:[#allocation7 + $0x2c] sm:$0xf]
    %v215 = vld [vmem:[#allocation7 + $0x30] sm:$0xf]
    %v216 = vld [vmem:[#allocation7 + $0x34] sm:$0xf]
    %v217 = vld [vmem:[#allocation7 + $0x38] sm:$0xf]
    %v218 = vld [vmem:[#allocation7 + $0x3c] sm:$0xf]
    %v219 = vld [vmem:[%s4] sm:$0x1]
    %v221 = vperm.slane %v219, 0
    %v239 = vunpack.c.l.b16 %v203
    %v240 = vunpack.c.l.b16 %v204
    %v241 = vunpack.c.l.b16 %v205
    %v242 = vunpack.c.l.b16 %v206
    %v243 = vunpack.c.l.b16 %v207
    %v244 = vunpack.c.l.b16 %v208
    %v245 = vunpack.c.l.b16 %v209
    %v246 = vunpack.c.l.b16 %v210
    %v247 = vunpack.c.l.b16 %v211
    %v248 = vunpack.c.l.b16 %v212
    %v249 = vunpack.c.l.b16 %v213
    %v250 = vunpack.c.l.b16 %v214
    %v251 = vunpack.c.l.b16 %v215
    %v252 = vunpack.c.l.b16 %v216
    %v253 = vunpack.c.l.b16 %v217
    %v254 = vunpack.c.l.b16 %v218
    %v255 = vpack.c.b16 %v240, %v239
    %v256 = vpack.c.b16 %v242, %v241
    %v257 = vpack.c.b16 %v244, %v243
    %v258 = vpack.c.b16 %v246, %v245
    %v259 = vpack.c.b16 %v248, %v247
    %v260 = vpack.c.b16 %v250, %v249
    %v261 = vpack.c.b16 %v252, %v251
    %v262 = vpack.c.b16 %v254, %v253
    %271 = vmatpush.bf16.msra.mxu0 %v262
    %272 = vmatpush.bf16.msra.mxu0 %v261
    %273 = vmatpush.bf16.msra.mxu0 %v260
    %274 = vmatpush.bf16.msra.mxu0 %v259
    %275 = vmatpush.bf16.msra.mxu0 %v258
    %276 = vmatpush.bf16.msra.mxu0 %v257
    %277 = vmatpush.bf16.msra.mxu0 %v256
    %278 = vmatpush.bf16.msra.mxu0 %v255
    %279 = vmatmul.bf16.gmra.mxu0 %v202
    %v280 = vpop.f32.mrf.mxu0
    %v281 = vadd.f32 %v221, %v280
    %v282 = vpop.f32.mrf.mxu0
    %v283 = vadd.f32 %v221, %v282
    %284 = vdwg.mxu0
    %285 = vst [vmem:[#allocation8] sm:$0xff] %v281
    %286 = vst [vmem:[#allocation8 + $0x8] sm:$0xff] %v283
    // Predicated region
    $region34: #{tpu_custom_call.1} parent=1 // pred_check
      _
    $region35: #{tpu_custom_call.1} parent=1 // pred_check_branch
      %288 = sbr.rel (0) target = $region37
    $region36: #{tpu_custom_call.1} parent=1 // pred_region
      %290 = vsyncadd [#allocation4], 0
      %s291 = sshll.u32 [#allocation8], 4
      %s292 = int_to_ptr.vmem [resolvable:$true] %s291
      %s293 = sshll.u32 %s5, 4
      %s294 = int_to_ptr.hbm [resolvable:$true] %s293
      %299 = dma.vmem_to_hbm [thread:$0]  %s292, 256, %s294, [#allocation4], 128, 128, 8
    $region37: #{tpu_custom_call.1} parent=1 // pred_fallthru
      _
    // Predicated region
    $region38: #{tpu_custom_call.1} parent=1 // pred_check
      _
    $region39: #{tpu_custom_call.1} parent=1 // pred_check_branch
      %301 = sbr.rel (0) target = $region41
    $region40: #{tpu_custom_call.1} parent=1 // pred_region
      %303 = dma.done [#allocation4], 256
    $region41: #{tpu_custom_call.1} parent=1 // pred_fallthru
      _
    %304 = vsyncpa [#allocation3], 1
    %305 = vsyncpa [#allocation6], 1
    %306 = vsyncpa [#allocation4], 1

</llo_original>
